<compile_context>
chip_gen: v7x
topology: tpu7x:2x2x1
jax: 0.10.0
libtpu: 0.0.40
codegen_flags: <defaults>
</compile_context>

<pallas_src>
import jax
import jax.numpy as jnp
from jax.experimental import pallas as pl
from jax.experimental.pallas import tpu as pltpu

LANE = 128          # lane width: batch-tile granularity
F_IN = 5            # input features of hidden1

# Rough VMEM bytes per batch row at f32: the (tile_b, 5) x tile is lane-padded
# to 128 lanes and double-buffered (2*512 B), plus h1/h2/h3 temporaries
# (~1.25 KiB worst case) and the double-buffered output slab (64 B).
_VMEM_BYTES_PER_ROW = 3072


def _round_up(x, m):
    return ((x + m - 1) // m) * m


def mlp_kernel(x_ref, w1_ref, w23_ref, p_ref, o_ref):
    """Fused 4-layer MLP for one batch tile.

    x_ref   : (tile_b, 5)   native (batch, feature) rows straight from HBM
    w1_ref  : (64, 5)       hidden1 weight, PyTorch (out, in) orientation
    w23_ref : (96, 64)      rows 0:64 = hidden2 W, rows 64:96 = hidden3 W
    p_ref   : (193, 1)      [b1(64); b2(64); b3(32); w4(32); b4(1)] column
    o_ref   : (1, tile_b)   lane-dense output slab
    """
    x = x_ref[...]
    # Layer 1: contract the 5-wide feature axis of BOTH operands ("NT" matmul)
    # so the result is (64, tile_b): features on sublanes, batch on lanes.
    h = jax.lax.dot_general(
        w1_ref[...], x, (((1,), (1,)), ((), ())),
        preferred_element_type=jnp.float32) + p_ref[0:64, :]
    h = jnp.maximum(h, 0.0)
    h = jnp.dot(w23_ref[0:64, :], h,
                preferred_element_type=jnp.float32) + p_ref[64:128, :]
    h = jnp.maximum(h, 0.0)
    h = jnp.dot(w23_ref[64:96, :], h,
                preferred_element_type=jnp.float32) + p_ref[128:160, :]
    h = jnp.maximum(h, 0.0)
    # Final (32 -> 1) layer on the VPU/XLU: broadcast-mul + sublane reduce,
    # avoiding a 1-row MXU pass.
    out = jnp.sum(p_ref[160:192, :] * h, axis=0, keepdims=True) + p_ref[192:193, :]
    o_ref[...] = out.astype(o_ref.dtype)


def basic_model_forward(x, params, *, tile_b=16384):
    """Run the fused MLP kernel.

    x      : (B, 5) float array, PyTorch-style (batch, features)
    params : [(w1,b1),(w2,b2),(w3,b3),(w4,b4)] with PyTorch shapes
             w: (out, in), b: (out,)
    tile_b : requested batch tile, rounded to a multiple of 128 lanes and
             capped by physical VMEM and the batch size.  Sweep 8192-32768
             on v5e/v6e for peak throughput.
    """
    (w1, b1), (w2, b2), (w3, b3), (w4, b4) = params
    B, f_in = x.shape
    assert f_in == F_IN == w1.shape[1], (f_in, w1.shape)

    # ---- physical-VMEM-aware batch-tile selection ---------------------------
    try:
        phys_vmem = int(pltpu.get_tpu_info().vmem_capacity_bytes)
    except Exception:
        phys_vmem = 64 << 20        # conservative fallback (v7x per-TC VMEM)

    tile_b = max(LANE, (int(tile_b) // LANE) * LANE)
    # Keep the working set comfortably under physical VMEM
    # (v7x 64 MiB -> ~10.8K rows, v5e/v6e 128 MiB -> ~21.7K rows).
    vmem_cap_rows = max(LANE, ((phys_vmem // 2) // _VMEM_BYTES_PER_ROW) // LANE * LANE)
    tile_b = min(tile_b, vmem_cap_rows)

    b_lane = _round_up(B, LANE)
    tile_b = min(tile_b, b_lane)                 # don't over-allocate for tiny B
    # Keep >= 2 grid steps whenever the batch allows it so the "parallel"
    # batch axis can be sharded across both TensorCores on v7x.
    # TODO(synk): verify in a trace that Mosaic actually shards this axis on
    # v7x; otherwise switch to pltpu.CORE_PARALLEL / an explicit core split.
    if b_lane >= 2 * LANE:
        tile_b = min(tile_b, _round_up(b_lane // 2, LANE))

    grid_n = -(-B // tile_b)                     # ceil-div; last block may be ragged
    b_pad = grid_n * tile_b

    # ---- parameter packing (tiny one-time work; 3 resident input streams) ---
    x_c = x.astype(jnp.float32)                  # no pad, no transpose
    w1_c = w1.astype(jnp.float32)                # (64, 5)
    w23_c = jnp.concatenate([w2, w3], axis=0).astype(jnp.float32)   # (96, 64)
    pvec = jnp.concatenate(
        [b1.reshape(-1), b2.reshape(-1), b3.reshape(-1),
         w4.reshape(-1), b4.reshape(-1)]).astype(jnp.float32).reshape(-1, 1)  # (193, 1)

    vmem_limit = min(phys_vmem * 3 // 4,
                     tile_b * _VMEM_BYTES_PER_ROW + (8 << 20))
    vmem_limit = int(max(vmem_limit, 16 << 20))

    out_t = pl.pallas_call(
        mlp_kernel,
        out_shape=jax.ShapeDtypeStruct((1, b_pad), jnp.float32),
        grid_spec=pltpu.PrefetchScalarGridSpec(
            num_scalar_prefetch=0,
            grid=(grid_n,),
            in_specs=[
                # x: one lane-aligned batch tile per step.  The last (ragged)
                # tile may over-read past B; those lanes produce garbage that
                # is never returned (every op is per-lane independent).
                pl.BlockSpec((tile_b, F_IN), lambda i: (i, 0)),
                # parameters: whole array resident, same block every step.
                pl.BlockSpec(w1_c.shape, lambda i: (0, 0)),
                pl.BlockSpec(w23_c.shape, lambda i: (0, 0)),
                pl.BlockSpec(pvec.shape, lambda i: (0, 0)),
            ],
            out_specs=pl.BlockSpec((1, tile_b), lambda i: (0, i)),
        ),
        compiler_params=pltpu.CompilerParams(
            dimension_semantics=("parallel",),
            vmem_limit_bytes=vmem_limit),
    )(x_c, w1_c, w23_c, pvec)

    # back to PyTorch (batch, 1) layout, dropping any tile padding
    return out_t[0, :B].reshape(B, 1)


def init_params(key):
    """Deterministic init with PyTorch nn.Linear shapes: w (out, in), b (out,)."""
    dims = [(5, 64), (64, 64), (64, 32), (32, 1)]
    params = []
    for (fan_in, fan_out) in dims:
        key, kw, kb = jax.random.split(key, 3)
        bound = 1.0 / jnp.sqrt(fan_in)
        w = jax.random.uniform(kw, (fan_out, fan_in), jnp.float32, -bound, bound)
        b = jax.random.uniform(kb, (fan_out,), jnp.float32, -bound, bound)
        params.append((w, b))
    return params


def reference_forward(x, params):
    """Plain-JAX reference matching the PyTorch module."""
    (w1, b1), (w2, b2), (w3, b3), (w4, b4) = params
    h = jnp.maximum(x @ w1.T + b1, 0.0)
    h = jnp.maximum(h @ w2.T + b2, 0.0)
    h = jnp.maximum(h @ w3.T + b3, 0.0)
    return h @ w4.T + b4


if __name__ == "__main__":
    key = jax.random.PRNGKey(0)
    key, kx = jax.random.split(key)

    B = 8  # small synthetic batch; the module implies 5 input features
    x = jax.random.normal(kx, (B, F_IN), dtype=jnp.float32)
    params = init_params(key)

    out = jax.block_until_ready(basic_model_forward(x, params))
    ref = reference_forward(x, params)

    assert out.shape == (B, 1), out.shape
    assert jnp.allclose(out, ref, atol=1e-4, rtol=1e-4), "mismatch vs reference"

    print("KERNEL_OK")
</pallas_src>

<mosaic_0001>
module attributes {stable_mosaic.version = 11 : i64} {
  func.func @mlp_kernel(%arg0: i32, %arg1: memref<128x5xf32, #tpu.memory_space<vmem>>, %arg2: memref<64x5xf32, #tpu.memory_space<vmem>>, %arg3: memref<96x64xf32, #tpu.memory_space<vmem>>, %arg4: memref<193x1xf32, #tpu.memory_space<vmem>>, %arg5: memref<1x128xf32, #tpu.memory_space<vmem>>) attributes {dimension_semantics = [#tpu.dimension_semantics<parallel>], iteration_bounds = array<i64: 1>, scalar_prefetch = 0 : i64, scratch_operands = 0 : i64, tpu.core_type = #tpu.core_type<tc>, window_params = [{transform_indices = @transform_0, window_bounds = array<i64: 128, 5>}, {pipeline_mode = #tpu.pipeline_mode<synchronous>, transform_indices = @transform_1, window_bounds = array<i64: 64, 5>}, {pipeline_mode = #tpu.pipeline_mode<synchronous>, transform_indices = @transform_2, window_bounds = array<i64: 96, 64>}, {pipeline_mode = #tpu.pipeline_mode<synchronous>, transform_indices = @transform_3, window_bounds = array<i64: 193, 1>}, {transform_indices = @transform_4, window_bounds = array<i64: 1, 128>}]} {
    %c0 = arith.constant 0 : index
    %c0_0 = arith.constant 0 : index
    %0 = vector.load %arg1[%c0, %c0_0] : memref<128x5xf32, #tpu.memory_space<vmem>>, vector<128x5xf32>
    %c0_1 = arith.constant 0 : index
    %c0_2 = arith.constant 0 : index
    %1 = vector.load %arg2[%c0_1, %c0_2] : memref<64x5xf32, #tpu.memory_space<vmem>>, vector<64x5xf32>
    %cst = arith.constant dense<0.000000e+00> : vector<64x128xf32>
    %2 = tpu.matmul %1, %0, %cst {dimension_numbers = #tpu.dot_dimension_numbers<[1], [1], [0], [0], [0, 0, 1, 0], [], []>} : vector<64x5xf32>, vector<128x5xf32>, vector<64x128xf32> -> vector<64x128xf32>
    %c0_3 = arith.constant 0 : index
    %c0_4 = arith.constant 0 : index
    %3 = vector.load %arg4[%c0_3, %c0_4] : memref<193x1xf32, #tpu.memory_space<vmem>>, vector<64x1xf32>
    %4 = vector.broadcast %3 : vector<64x1xf32> to vector<64x128xf32>
    %5 = arith.addf %2, %4 : vector<64x128xf32>
    %cst_5 = arith.constant 0.000000e+00 : f32
    %6 = vector.broadcast %cst_5 : f32 to vector<64x128xf32>
    %7 = arith.maximumf %5, %6 : vector<64x128xf32>
    %c0_6 = arith.constant 0 : index
    %c0_7 = arith.constant 0 : index
    %8 = vector.load %arg3[%c0_6, %c0_7] : memref<96x64xf32, #tpu.memory_space<vmem>>, vector<64x64xf32>
    %cst_8 = arith.constant dense<0.000000e+00> : vector<64x128xf32>
    %9 = tpu.matmul %8, %7, %cst_8 {dimension_numbers = #tpu.dot_dimension_numbers<[1], [0], [0], [1], [0, 0, 1, 1], [], []>} : vector<64x64xf32>, vector<64x128xf32>, vector<64x128xf32> -> vector<64x128xf32>
    %c64 = arith.constant 64 : index
    %c0_9 = arith.constant 0 : index
    %10 = vector.load %arg4[%c64, %c0_9] : memref<193x1xf32, #tpu.memory_space<vmem>>, vector<64x1xf32>
    %11 = vector.broadcast %10 : vector<64x1xf32> to vector<64x128xf32>
    %12 = arith.addf %9, %11 : vector<64x128xf32>
    %cst_10 = arith.constant 0.000000e+00 : f32
    %13 = vector.broadcast %cst_10 : f32 to vector<64x128xf32>
    %14 = arith.maximumf %12, %13 : vector<64x128xf32>
    %c64_11 = arith.constant 64 : index
    %c0_12 = arith.constant 0 : index
    %15 = vector.load %arg3[%c64_11, %c0_12] : memref<96x64xf32, #tpu.memory_space<vmem>>, vector<32x64xf32>
    %cst_13 = arith.constant dense<0.000000e+00> : vector<32x128xf32>
    %16 = tpu.matmul %15, %14, %cst_13 {dimension_numbers = #tpu.dot_dimension_numbers<[1], [0], [0], [1], [0, 0, 1, 1], [], []>} : vector<32x64xf32>, vector<64x128xf32>, vector<32x128xf32> -> vector<32x128xf32>
    %c128 = arith.constant 128 : index
    %c0_14 = arith.constant 0 : index
    %17 = vector.load %arg4[%c128, %c0_14] : memref<193x1xf32, #tpu.memory_space<vmem>>, vector<32x1xf32>
    %18 = vector.broadcast %17 : vector<32x1xf32> to vector<32x128xf32>
    %19 = arith.addf %16, %18 : vector<32x128xf32>
    %cst_15 = arith.constant 0.000000e+00 : f32
    %20 = vector.broadcast %cst_15 : f32 to vector<32x128xf32>
    %21 = arith.maximumf %19, %20 : vector<32x128xf32>
    %c160 = arith.constant 160 : index
    %c0_16 = arith.constant 0 : index
    %22 = vector.load %arg4[%c160, %c0_16] : memref<193x1xf32, #tpu.memory_space<vmem>>, vector<32x1xf32>
    %23 = vector.broadcast %22 : vector<32x1xf32> to vector<32x128xf32>
    %24 = arith.mulf %23, %21 : vector<32x128xf32>
    %cst_17 = arith.constant dense<0.000000e+00> : vector<128xf32>
    %25 = vector.multi_reduction <add>, %24, %cst_17 [0] : vector<32x128xf32> to vector<128xf32>
    %26 = vector.shape_cast %25 : vector<128xf32> to vector<1x128xf32>
    %c192 = arith.constant 192 : index
    %c0_18 = arith.constant 0 : index
    %27 = vector.load %arg4[%c192, %c0_18] : memref<193x1xf32, #tpu.memory_space<vmem>>, vector<1x1xf32>
    %28 = vector.broadcast %27 : vector<1x1xf32> to vector<1x128xf32>
    %29 = arith.addf %26, %28 : vector<1x128xf32>
    %c0_19 = arith.constant 0 : index
    %c0_20 = arith.constant 0 : index
    %30 = vector.load %arg5[%c0_19, %c0_20] : memref<1x128xf32, #tpu.memory_space<vmem>>, vector<1x128xf32>
    tpu.vector_store %arg5[%c0_19, %c0_20], %29 {strides = array<i32>} : memref<1x128xf32, #tpu.memory_space<vmem>>, vector<1x128xf32>,
    return
  }
  func.func @transform_0(%arg0: i32) -> (i32, i32) {
    %c0_i32 = arith.constant 0 : i32
    %c0_i32_0 = arith.constant 0 : i32
    return %arg0, %c0_i32 : i32, i32
  }
  func.func @transform_1(%arg0: i32) -> (i32, i32) {
    %c0_i32 = arith.constant 0 : i32
    %c0_i32_0 = arith.constant 0 : i32
    %c0_i32_1 = arith.constant 0 : i32
    return %c0_i32, %c0_i32_0 : i32, i32
  }
  func.func @transform_2(%arg0: i32) -> (i32, i32) {
    %c0_i32 = arith.constant 0 : i32
    %c0_i32_0 = arith.constant 0 : i32
    %c0_i32_1 = arith.constant 0 : i32
    return %c0_i32, %c0_i32_0 : i32, i32
  }
  func.func @transform_3(%arg0: i32) -> (i32, i32) {
    %c0_i32 = arith.constant 0 : i32
    %c0_i32_0 = arith.constant 0 : i32
    %c0_i32_1 = arith.constant 0 : i32
    return %c0_i32, %c0_i32_0 : i32, i32
  }
  func.func @transform_4(%arg0: i32) -> (i32, i32) {
    %c0_i32 = arith.constant 0 : i32
    %c0_i32_0 = arith.constant 0 : i32
    return %c0_i32, %arg0 : i32, i32
  }
}

</mosaic_0001>

<llo_original>
// kernel: tpu_custom_call.1
$region0: #{tpu_custom_call.1}
  #allocation0 [shape = 'u32[]', space=smem, size = 0x4, offset = 0x4, fixed_abs, tag = 'smem constant byte address 0x4 - core index']
  #allocation1 [shape = 'u32[144,128]{1,0:T(1,128)}', space=vmem, size = 0x12000, scoped, tag = 'internal scratch']
  %s0 = inlined_call_operand.vmem [shape: f32[8,5], index: 0, kind: input, shape index: {}]
  %s1 = inlined_call_operand.vmem [shape: f32[64,5], index: 1, kind: input, shape index: {}]
  %s2 = inlined_call_operand.vmem [shape: f32[96,64], index: 2, kind: input, shape index: {}]
  %s3 = inlined_call_operand.vmem [shape: f32[193,1], index: 3, kind: input, shape index: {}]
  %s4 = inlined_call_operand.hbm [shape: f32[1,128], index: 4, kind: output, shape index: {}]
  %s5 = sld [smem:[#allocation0]]
  $region26: #{tpu_custom_call.1} parent=0
    _
  %s7 = ssub.s32 1, %s5
  %s8 = scalar_select 0, %s7, %s5
  $region1: #{tpu_custom_call.1} parent=0
    #allocation2 [shape = 'u8[512]{0}', space=vmem, size = 0x400, scoped, tag = 'output window, operand 0, single buffered']
    #allocation3 [shape = 's32[1]{0}', space=sflag, size = 0x4, scoped, tag = 'scoped memory for tpu_custom_call.1']
    %9 = vsyncpa [#allocation3], 0
    // Predicated region
    $region2: #{tpu_custom_call.1} parent=1 // pred_check
      _
    $region3: #{tpu_custom_call.1} parent=1 // pred_check_branch
      %11 = sbr.rel (0) target = $region5
    $region4: #{tpu_custom_call.1} parent=1 // pred_region
      _
    $region5: #{tpu_custom_call.1} parent=1 // pred_fallthru
      _
    // Predicated region
    $region6: #{tpu_custom_call.1} parent=1 // pred_check
      _
    $region7: #{tpu_custom_call.1} parent=1 // pred_check_branch
      %13 = sbr.rel (0) target = $region9
    $region8: #{tpu_custom_call.1} parent=1 // pred_region
      _
    $region9: #{tpu_custom_call.1} parent=1 // pred_fallthru
      _
    // Predicated region
    $region10: #{tpu_custom_call.1} parent=1 // pred_check
      _
    $region11: #{tpu_custom_call.1} parent=1 // pred_check_branch
      %15 = sbr.rel (0) target = $region13
    $region12: #{tpu_custom_call.1} parent=1 // pred_region
      _
    $region13: #{tpu_custom_call.1} parent=1 // pred_fallthru
      _
    // Predicated region
    $region14: #{tpu_custom_call.1} parent=1 // pred_check
      _
    $region15: #{tpu_custom_call.1} parent=1 // pred_check_branch
      %17 = sbr.rel (0) target = $region17
    $region16: #{tpu_custom_call.1} parent=1 // pred_region
      _
    $region17: #{tpu_custom_call.1} parent=1 // pred_fallthru
      _
    %v18 = vld [vmem:[%s0] sm:$0xff]
    %v19 = vld [vmem:[%s0 + $0x8] sm:$0xff]
    %v20 = vld [vmem:[%s0 + $0x10] sm:$0xff]
    %v21 = vld [vmem:[%s0 + $0x18] sm:$0xff]
    %v22 = vld [vmem:[%s0 + $0x20] sm:$0xff]
    %v23 = vld [vmem:[%s0 + $0x28] sm:$0xff]
    %v24 = vld [vmem:[%s0 + $0x30] sm:$0xff]
    %v25 = vld [vmem:[%s0 + $0x38] sm:$0xff]
    %v26 = vld [vmem:[%s0 + $0x40] sm:$0xff]
    %v27 = vld [vmem:[%s0 + $0x48] sm:$0xff]
    %v28 = vld [vmem:[%s0 + $0x50] sm:$0xff]
    %v29 = vld [vmem:[%s0 + $0x58] sm:$0xff]
    %v30 = vld [vmem:[%s0 + $0x60] sm:$0xff]
    %v31 = vld [vmem:[%s0 + $0x68] sm:$0xff]
    %v32 = vld [vmem:[%s0 + $0x70] sm:$0xff]
    %v33 = vld [vmem:[%s0 + $0x78] sm:$0xff]
    %v34 = vld [vmem:[%s1] sm:$0xff]
    %v35 = vld [vmem:[%s1 + $0x8] sm:$0xff]
    %v36 = vld [vmem:[%s1 + $0x10] sm:$0xff]
    %v37 = vld [vmem:[%s1 + $0x18] sm:$0xff]
    %v38 = vld [vmem:[%s1 + $0x20] sm:$0xff]
    %v39 = vld [vmem:[%s1 + $0x28] sm:$0xff]
    %v40 = vld [vmem:[%s1 + $0x30] sm:$0xff]
    %v41 = vld [vmem:[%s1 + $0x38] sm:$0xff]
    %v42 = vld [vmem:[%s3] sm:$0xff]
    %v43 = vld [vmem:[%s3 + $0x8] sm:$0xff]
    %v44 = vld [vmem:[%s3 + $0x10] sm:$0xff]
    %v45 = vld [vmem:[%s3 + $0x18] sm:$0xff]
    %v46 = vld [vmem:[%s3 + $0x20] sm:$0xff]
    %v47 = vld [vmem:[%s3 + $0x28] sm:$0xff]
    %v48 = vld [vmem:[%s3 + $0x30] sm:$0xff]
    %v49 = vld [vmem:[%s3 + $0x38] sm:$0xff]
    %51 = vset.pattern.permute.xlu0 0
    %52 = vperm.xlu0 %51, %v42
    %v53 = vpop.permute.xlu0 %52
    %56 = vset.pattern.permute.xlu0 0
    %57 = vperm.xlu0 %56, %v43
    %v58 = vpop.permute.xlu0 %57
    %61 = vset.pattern.permute.xlu0 0
    %62 = vperm.xlu0 %61, %v44
    %v63 = vpop.permute.xlu0 %62
    %66 = vset.pattern.permute.xlu0 0
    %67 = vperm.xlu0 %66, %v45
    %v68 = vpop.permute.xlu0 %67
    %71 = vset.pattern.permute.xlu0 0
    %72 = vperm.xlu0 %71, %v46
    %v73 = vpop.permute.xlu0 %72
    %76 = vset.pattern.permute.xlu0 0
    %77 = vperm.xlu0 %76, %v47
    %v78 = vpop.permute.xlu0 %77
    %81 = vset.pattern.permute.xlu0 0
    %82 = vperm.xlu0 %81, %v48
    %v83 = vpop.permute.xlu0 %82
    %86 = vset.pattern.permute.xlu0 0
    %87 = vperm.xlu0 %86, %v49
    %v88 = vpop.permute.xlu0 %87
    %vm90 = vcmask 39936
    %v92 = vsel %vm90, %v34, 0
    %v95 = vsel %vm90, %v35, 0
    %v98 = vsel %vm90, %v36, 0
    %v101 = vsel %vm90, %v37, 0
    %v104 = vsel %vm90, %v38, 0
    %v107 = vsel %vm90, %v39, 0
    %v110 = vsel %vm90, %v40, 0
    %v113 = vsel %vm90, %v41, 0
    %v116 = vsel %vm90, %v18, 0
    %v119 = vsel %vm90, %v19, 0
    %v122 = vsel %vm90, %v20, 0
    %v125 = vsel %vm90, %v21, 0
    %v128 = vsel %vm90, %v22, 0
    %v131 = vsel %vm90, %v23, 0
    %v134 = vsel %vm90, %v24, 0
    %v137 = vsel %vm90, %v25, 0
    %v140 = vsel %vm90, %v26, 0
    %v143 = vsel %vm90, %v27, 0
    %v146 = vsel %vm90, %v28, 0
    %v149 = vsel %vm90, %v29, 0
    %v152 = vsel %vm90, %v30, 0
    %v155 = vsel %vm90, %v31, 0
    %v158 = vsel %vm90, %v32, 0
    %v161 = vsel %vm90, %v33, 0
    %163 = vmatprep.subr.mxu0 0.0
    %164 = vmatpush1.xpose.msra.mxu0 %v116
    %165 = vmatprep.subr.mxu0 0.0
    %166 = vmatpush1.xpose.msra.mxu0 %v119
    %167 = vmatprep.subr.mxu0 0.0
    %168 = vmatpush1.xpose.msra.mxu0 %v122
    %169 = vmatprep.subr.mxu0 0.0
    %170 = vmatpush1.xpose.msra.mxu0 %v125
    %171 = vmatprep.subr.mxu0 0.0
    %172 = vmatpush1.xpose.msra.mxu0 %v128
    %173 = vmatprep.subr.mxu0 0.0
    %174 = vmatpush1.xpose.msra.mxu0 %v131
    %175 = vmatprep.subr.mxu0 0.0
    %176 = vmatpush1.xpose.msra.mxu0 %v134
    %177 = vmatprep.subr.mxu0 0.0
    %178 = vmatpush1.xpose.msra.mxu0 %v137
    %179 = vmatprep.subr.mxu0 0.0
    %180 = vmatpush1.xpose.msra.mxu0 %v140
    %181 = vmatprep.subr.mxu0 0.0
    %182 = vmatpush1.xpose.msra.mxu0 %v143
    %183 = vmatprep.subr.mxu0 0.0
    %184 = vmatpush1.xpose.msra.mxu0 %v146
    %185 = vmatprep.subr.mxu0 0.0
    %186 = vmatpush1.xpose.msra.mxu0 %v149
    %187 = vmatprep.subr.mxu0 0.0
    %188 = vmatpush1.xpose.msra.mxu0 %v152
    %189 = vmatprep.subr.mxu0 0.0
    %190 = vmatpush1.xpose.msra.mxu0 %v155
    %191 = vmatprep.subr.mxu0 0.0
    %192 = vmatpush1.xpose.msra.mxu0 %v158
    %193 = vmatprep.subr.mxu0 0.0
    %194 = vmatpush1.xpose.msra.mxu0 %v161
    %195 = vmatprep.subr.mxu0 0.0
    %196 = vmatpush1.xpose.msra.mxu0 0.0
    %197 = vmatprep.subr.mxu0 0.0
    %198 = vmatpush1.xpose.msra.mxu0 0.0
    %199 = vmatprep.subr.mxu0 0.0
    %200 = vmatpush1.xpose.msra.mxu0 0.0
    %201 = vmatprep.subr.mxu0 0.0
    %202 = vmatpush1.xpose.msra.mxu0 0.0
    %203 = vmatprep.subr.mxu0 0.0
    %204 = vmatpush1.xpose.msra.mxu0 0.0
    %205 = vmatprep.subr.mxu0 0.0
    %206 = vmatpush1.xpose.msra.mxu0 0.0
    %207 = vmatprep.subr.mxu0 0.0
    %208 = vmatpush1.xpose.msra.mxu0 0.0
    %209 = vmatprep.subr.mxu0 0.0
    %210 = vmatpush1.xpose.msra.mxu0 0.0
    %211 = vmatprep.subr.mxu0 0.0
    %212 = vmatpush1.xpose.msra.mxu0 0.0
    %213 = vmatprep.subr.mxu0 0.0
    %214 = vmatpush1.xpose.msra.mxu0 0.0
    %215 = vmatprep.subr.mxu0 0.0
    %216 = vmatpush1.xpose.msra.mxu0 0.0
    %217 = vmatprep.subr.mxu0 0.0
    %218 = vmatpush1.xpose.msra.mxu0 0.0
    %219 = vmatprep.subr.mxu0 0.0
    %220 = vmatpush1.xpose.msra.mxu0 0.0
    %221 = vmatprep.subr.mxu0 0.0
    %222 = vmatpush1.xpose.msra.mxu0 0.0
    %223 = vmatprep.subr.mxu0 0.0
    %224 = vmatpush1.xpose.msra.mxu0 0.0
    %225 = vmatprep.subr.mxu0 0.0
    %226 = vmatpush1.xpose.msra.mxu0 0.0
    %227 = vmatprep.mubr.f32.mxu0 0.0
    %228 = vmatmul.mubr.f32.gmra.mrb[0].mxu0 %v92
    %v229 = vpop.f32.mrb[0].mxu0
    %v230 = vadd.f32 %v53, %v229
    %v231 = vpop.f32.mrb[0].mxu0
    %232 = vmatprep.mubr.f32.mxu0 0.0
    %233 = vmatmul.mubr.f32.gmra.mrb[0].mxu0 %v95
    %v234 = vpop.f32.mrb[0].mxu0
    %v235 = vadd.f32 %v58, %v234
    %v236 = vpop.f32.mrb[0].mxu0
    %237 = vmatprep.mubr.f32.mxu0 0.0
    %238 = vmatmul.mubr.f32.gmra.mrb[0].mxu0 %v98
    %v239 = vpop.f32.mrb[0].mxu0
    %v240 = vadd.f32 %v63, %v239
    %v241 = vpop.f32.mrb[0].mxu0
    %242 = vmatprep.mubr.f32.mxu0 0.0
    %243 = vmatmul.mubr.f32.gmra.mrb[0].mxu0 %v101
    %v244 = vpop.f32.mrb[0].mxu0
    %v245 = vadd.f32 %v68, %v244
    %v246 = vpop.f32.mrb[0].mxu0
    %247 = vmatprep.mubr.f32.mxu0 0.0
    %248 = vmatmul.mubr.f32.gmra.mrb[0].mxu0 %v104
    %v249 = vpop.f32.mrb[0].mxu0
    %v250 = vadd.f32 %v73, %v249
    %v251 = vpop.f32.mrb[0].mxu0
    %252 = vmatprep.mubr.f32.mxu0 0.0
    %253 = vmatmul.mubr.f32.gmra.mrb[0].mxu0 %v107
    %v254 = vpop.f32.mrb[0].mxu0
    %v255 = vadd.f32 %v78, %v254
    %v256 = vpop.f32.mrb[0].mxu0
    %257 = vmatprep.mubr.f32.mxu0 0.0
    %258 = vmatmul.mubr.f32.gmra.mrb[0].mxu0 %v110
    %v259 = vpop.f32.mrb[0].mxu0
    %v260 = vadd.f32 %v83, %v259
    %v261 = vpop.f32.mrb[0].mxu0
    %262 = vmatprep.mubr.f32.mxu0 0.0
    %263 = vmatmul.mubr.f32.gmra.mrb[0].mxu0 %v113
    %v264 = vpop.f32.mrb[0].mxu0
    %v265 = vadd.f32 %v88, %v264
    %v266 = vpop.f32.mrb[0].mxu0
    %267 = vdwg.mxu0
    %v268 = vmax.f32 %v230, 0.0
    %v269 = vmax.f32 %v235, 0.0
    %v270 = vmax.f32 %v240, 0.0
    %v271 = vmax.f32 %v245, 0.0
    %v272 = vmax.f32 %v250, 0.0
    %v273 = vmax.f32 %v255, 0.0
    %v274 = vmax.f32 %v260, 0.0
    %v275 = vmax.f32 %v265, 0.0
    %v276 = vld [vmem:[%s2] sm:$0xff]
    %v277 = vld [vmem:[%s2 + $0x8] sm:$0xff]
    %v278 = vld [vmem:[%s2 + $0x10] sm:$0xff]
    %v279 = vld [vmem:[%s2 + $0x18] sm:$0xff]
    %v280 = vld [vmem:[%s2 + $0x20] sm:$0xff]
    %v281 = vld [vmem:[%s2 + $0x28] sm:$0xff]
    %v282 = vld [vmem:[%s2 + $0x30] sm:$0xff]
    %v283 = vld [vmem:[%s2 + $0x38] sm:$0xff]
    %v284 = vld [vmem:[%s3 + $0x40] sm:$0xff]
    %v285 = vld [vmem:[%s3 + $0x48] sm:$0xff]
    %v286 = vld [vmem:[%s3 + $0x50] sm:$0xff]
    %v287 = vld [vmem:[%s3 + $0x58] sm:$0xff]
    %v288 = vld [vmem:[%s3 + $0x60] sm:$0xff]
    %v289 = vld [vmem:[%s3 + $0x68] sm:$0xff]
    %v290 = vld [vmem:[%s3 + $0x70] sm:$0xff]
    %v291 = vld [vmem:[%s3 + $0x78] sm:$0xff]
    %293 = vset.pattern.permute.xlu0 0
    %294 = vperm.xlu0 %293, %v284
    %v295 = vpop.permute.xlu0 %294
    %298 = vset.pattern.permute.xlu0 0
    %299 = vperm.xlu0 %298, %v285
    %v300 = vpop.permute.xlu0 %299
    %303 = vset.pattern.permute.xlu0 0
    %304 = vperm.xlu0 %303, %v286
    %v305 = vpop.permute.xlu0 %304
    %308 = vset.pattern.permute.xlu0 0
    %309 = vperm.xlu0 %308, %v287
    %v310 = vpop.permute.xlu0 %309
    %313 = vset.pattern.permute.xlu0 0
    %314 = vperm.xlu0 %313, %v288
    %v315 = vpop.permute.xlu0 %314
    %318 = vset.pattern.permute.xlu0 0
    %319 = vperm.xlu0 %318, %v289
    %v320 = vpop.permute.xlu0 %319
    %323 = vset.pattern.permute.xlu0 0
    %324 = vperm.xlu0 %323, %v290
    %v325 = vpop.permute.xlu0 %324
    %328 = vset.pattern.permute.xlu0 0
    %329 = vperm.xlu0 %328, %v291
    %v330 = vpop.permute.xlu0 %329
    %vm332 = vcmask 523264
    %v334 = vsel %vm332, %v276, 0
    %v337 = vsel %vm332, %v277, 0
    %v340 = vsel %vm332, %v278, 0
    %v343 = vsel %vm332, %v279, 0
    %v346 = vsel %vm332, %v280, 0
    %v349 = vsel %vm332, %v281, 0
    %v352 = vsel %vm332, %v282, 0
    %v355 = vsel %vm332, %v283, 0
    %357 = vmatprep.subr.mxu0 0.0
    %358 = vmatpush1.msra.mxu0 %v268
    %359 = vmatprep.subr.mxu0 0.0
    %360 = vmatpush1.msra.mxu0 %v269
    %361 = vmatprep.subr.mxu0 0.0
    %362 = vmatpush1.msra.mxu0 %v270
    %363 = vmatprep.subr.mxu0 0.0
    %364 = vmatpush1.msra.mxu0 %v271
    %365 = vmatprep.subr.mxu0 0.0
    %366 = vmatpush1.msra.mxu0 %v272
    %367 = vmatprep.subr.mxu0 0.0
    %368 = vmatpush1.msra.mxu0 %v273
    %369 = vmatprep.subr.mxu0 0.0
    %370 = vmatpush1.msra.mxu0 %v274
    %371 = vmatprep.subr.mxu0 0.0
    %372 = vmatpush1.msra.mxu0 %v275
    %373 = vmatprep.subr.mxu0 0.0
    %374 = vmatpush1.msra.mxu0 0.0
    %375 = vmatprep.subr.mxu0 0.0
    %376 = vmatpush1.msra.mxu0 0.0
    %377 = vmatprep.subr.mxu0 0.0
    %378 = vmatpush1.msra.mxu0 0.0
    %379 = vmatprep.subr.mxu0 0.0
    %380 = vmatpush1.msra.mxu0 0.0
    %381 = vmatprep.subr.mxu0 0.0
    %382 = vmatpush1.msra.mxu0 0.0
    %383 = vmatprep.subr.mxu0 0.0
    %384 = vmatpush1.msra.mxu0 0.0
    %385 = vmatprep.subr.mxu0 0.0
    %386 = vmatpush1.msra.mxu0 0.0
    %387 = vmatprep.subr.mxu0 0.0
    %388 = vmatpush1.msra.mxu0 0.0
    %389 = vmatprep.subr.mxu0 0.0
    %390 = vmatpush1.msra.mxu0 0.0
    %391 = vmatprep.subr.mxu0 0.0
    %392 = vmatpush1.msra.mxu0 0.0
    %393 = vmatprep.subr.mxu0 0.0
    %394 = vmatpush1.msra.mxu0 0.0
    %395 = vmatprep.subr.mxu0 0.0
    %396 = vmatpush1.msra.mxu0 0.0
    %397 = vmatprep.subr.mxu0 0.0
    %398 = vmatpush1.msra.mxu0 0.0
    %399 = vmatprep.subr.mxu0 0.0
    %400 = vmatpush1.msra.mxu0 0.0
    %401 = vmatprep.subr.mxu0 0.0
    %402 = vmatpush1.msra.mxu0 0.0
    %403 = vmatprep.subr.mxu0 0.0
    %404 = vmatpush1.msra.mxu0 0.0
    %405 = vmatprep.subr.mxu0 0.0
    %406 = vmatpush1.msra.mxu0 0.0
    %407 = vmatprep.subr.mxu0 0.0
    %408 = vmatpush1.msra.mxu0 0.0
    %409 = vmatprep.subr.mxu0 0.0
    %410 = vmatpush1.msra.mxu0 0.0
    %411 = vmatprep.subr.mxu0 0.0
    %412 = vmatpush1.msra.mxu0 0.0
    %413 = vmatprep.subr.mxu0 0.0
    %414 = vmatpush1.msra.mxu0 0.0
    %415 = vmatprep.subr.mxu0 0.0
    %416 = vmatpush1.msra.mxu0 0.0
    %417 = vmatprep.subr.mxu0 0.0
    %418 = vmatpush1.msra.mxu0 0.0
    %419 = vmatprep.subr.mxu0 0.0
    %420 = vmatpush1.msra.mxu0 0.0
    %421 = vmatprep.mubr.f32.mxu0 0.0
    %422 = vmatmul.mubr.f32.gmra.mrb[0].mxu0 %v334
    %v423 = vpop.f32.mrb[0].mxu0
    %v424 = vadd.f32 %v295, %v423
    %v425 = vpop.f32.mrb[0].mxu0
    %426 = vmatprep.mubr.f32.mxu0 0.0
    %427 = vmatmul.mubr.f32.gmra.mrb[0].mxu0 %v337
    %v428 = vpop.f32.mrb[0].mxu0
    %v429 = vadd.f32 %v300, %v428
    %v430 = vpop.f32.mrb[0].mxu0
    %431 = vmatprep.mubr.f32.mxu0 0.0
    %432 = vmatmul.mubr.f32.gmra.mrb[0].mxu0 %v340
    %v433 = vpop.f32.mrb[0].mxu0
    %v434 = vadd.f32 %v305, %v433
    %v435 = vpop.f32.mrb[0].mxu0
    %436 = vmatprep.mubr.f32.mxu0 0.0
    %437 = vmatmul.mubr.f32.gmra.mrb[0].mxu0 %v343
    %v438 = vpop.f32.mrb[0].mxu0
    %v439 = vadd.f32 %v310, %v438
    %v440 = vpop.f32.mrb[0].mxu0
    %441 = vmatprep.mubr.f32.mxu0 0.0
    %442 = vmatmul.mubr.f32.gmra.mrb[0].mxu0 %v346
    %v443 = vpop.f32.mrb[0].mxu0
    %v444 = vadd.f32 %v315, %v443
    %v445 = vpop.f32.mrb[0].mxu0
    %446 = vmatprep.mubr.f32.mxu0 0.0
    %447 = vmatmul.mubr.f32.gmra.mrb[0].mxu0 %v349
    %v448 = vpop.f32.mrb[0].mxu0
    %v449 = vadd.f32 %v320, %v448
    %v450 = vpop.f32.mrb[0].mxu0
    %451 = vmatprep.mubr.f32.mxu0 0.0
    %452 = vmatmul.mubr.f32.gmra.mrb[0].mxu0 %v352
    %v453 = vpop.f32.mrb[0].mxu0
    %v454 = vadd.f32 %v325, %v453
    %v455 = vpop.f32.mrb[0].mxu0
    %456 = vmatprep.mubr.f32.mxu0 0.0
    %457 = vmatmul.mubr.f32.gmra.mrb[0].mxu0 %v355
    %v458 = vpop.f32.mrb[0].mxu0
    %v459 = vadd.f32 %v330, %v458
    %v460 = vpop.f32.mrb[0].mxu0
    %461 = vdwg.mxu0
    %v462 = vmax.f32 %v424, 0.0
    %v463 = vmax.f32 %v429, 0.0
    %v464 = vmax.f32 %v434, 0.0
    %v465 = vmax.f32 %v439, 0.0
    %v466 = vmax.f32 %v444, 0.0
    %v467 = vmax.f32 %v449, 0.0
    %v468 = vmax.f32 %v454, 0.0
    %v469 = vmax.f32 %v459, 0.0
    %v470 = vld [vmem:[%s2 + $0x40] sm:$0xff]
    %v471 = vld [vmem:[%s2 + $0x48] sm:$0xff]
    %v472 = vld [vmem:[%s2 + $0x50] sm:$0xff]
    %v473 = vld [vmem:[%s2 + $0x58] sm:$0xff]
    %v474 = vld [vmem:[%s3 + $0x80] sm:$0xff]
    %v475 = vld [vmem:[%s3 + $0x88] sm:$0xff]
    %v476 = vld [vmem:[%s3 + $0x90] sm:$0xff]
    %v477 = vld [vmem:[%s3 + $0x98] sm:$0xff]
    %479 = vset.pattern.permute.xlu0 0
    %480 = vperm.xlu0 %479, %v474
    %v481 = vpop.permute.xlu0 %480
    %484 = vset.pattern.permute.xlu0 0
    %485 = vperm.xlu0 %484, %v475
    %v486 = vpop.permute.xlu0 %485
    %489 = vset.pattern.permute.xlu0 0
    %490 = vperm.xlu0 %489, %v476
    %v491 = vpop.permute.xlu0 %490
    %494 = vset.pattern.permute.xlu0 0
    %495 = vperm.xlu0 %494, %v477
    %v496 = vpop.permute.xlu0 %495
    %v499 = vsel %vm332, %v470, 0
    %v502 = vsel %vm332, %v471, 0
    %v505 = vsel %vm332, %v472, 0
    %v508 = vsel %vm332, %v473, 0
    %510 = vmatprep.subr.mxu0 0.0
    %511 = vmatpush1.msra.mxu0 %v462
    %512 = vmatprep.subr.mxu0 0.0
    %513 = vmatpush1.msra.mxu0 %v463
    %514 = vmatprep.subr.mxu0 0.0
    %515 = vmatpush1.msra.mxu0 %v464
    %516 = vmatprep.subr.mxu0 0.0
    %517 = vmatpush1.msra.mxu0 %v465
    %518 = vmatprep.subr.mxu0 0.0
    %519 = vmatpush1.msra.mxu0 %v466
    %520 = vmatprep.subr.mxu0 0.0
    %521 = vmatpush1.msra.mxu0 %v467
    %522 = vmatprep.subr.mxu0 0.0
    %523 = vmatpush1.msra.mxu0 %v468
    %524 = vmatprep.subr.mxu0 0.0
    %525 = vmatpush1.msra.mxu0 %v469
    %526 = vmatprep.subr.mxu0 0.0
    %527 = vmatpush1.msra.mxu0 0.0
    %528 = vmatprep.subr.mxu0 0.0
    %529 = vmatpush1.msra.mxu0 0.0
    %530 = vmatprep.subr.mxu0 0.0
    %531 = vmatpush1.msra.mxu0 0.0
    %532 = vmatprep.subr.mxu0 0.0
    %533 = vmatpush1.msra.mxu0 0.0
    %534 = vmatprep.subr.mxu0 0.0
    %535 = vmatpush1.msra.mxu0 0.0
    %536 = vmatprep.subr.mxu0 0.0
    %537 = vmatpush1.msra.mxu0 0.0
    %538 = vmatprep.subr.mxu0 0.0
    %539 = vmatpush1.msra.mxu0 0.0
    %540 = vmatprep.subr.mxu0 0.0
    %541 = vmatpush1.msra.mxu0 0.0
    %542 = vmatprep.subr.mxu0 0.0
    %543 = vmatpush1.msra.mxu0 0.0
    %544 = vmatprep.subr.mxu0 0.0
    %545 = vmatpush1.msra.mxu0 0.0
    %546 = vmatprep.subr.mxu0 0.0
    %547 = vmatpush1.msra.mxu0 0.0
    %548 = vmatprep.subr.mxu0 0.0
    %549 = vmatpush1.msra.mxu0 0.0
    %550 = vmatprep.subr.mxu0 0.0
    %551 = vmatpush1.msra.mxu0 0.0
    %552 = vmatprep.subr.mxu0 0.0
    %553 = vmatpush1.msra.mxu0 0.0
    %554 = vmatprep.subr.mxu0 0.0
    %555 = vmatpush1.msra.mxu0 0.0
    %556 = vmatprep.subr.mxu0 0.0
    %557 = vmatpush1.msra.mxu0 0.0
    %558 = vmatprep.subr.mxu0 0.0
    %559 = vmatpush1.msra.mxu0 0.0
    %560 = vmatprep.subr.mxu0 0.0
    %561 = vmatpush1.msra.mxu0 0.0
    %562 = vmatprep.subr.mxu0 0.0
    %563 = vmatpush1.msra.mxu0 0.0
    %564 = vmatprep.subr.mxu0 0.0
    %565 = vmatpush1.msra.mxu0 0.0
    %566 = vmatprep.subr.mxu0 0.0
    %567 = vmatpush1.msra.mxu0 0.0
    %568 = vmatprep.subr.mxu0 0.0
    %569 = vmatpush1.msra.mxu0 0.0
    %570 = vmatprep.subr.mxu0 0.0
    %571 = vmatpush1.msra.mxu0 0.0
    %572 = vmatprep.subr.mxu0 0.0
    %573 = vmatpush1.msra.mxu0 0.0
    %574 = vmatprep.mubr.f32.mxu0 0.0
    %575 = vmatmul.mubr.f32.gmra.mrb[0].mxu0 %v499
    %v576 = vpop.f32.mrb[0].mxu0
    %v577 = vadd.f32 %v481, %v576
    %v578 = vpop.f32.mrb[0].mxu0
    %579 = vmatprep.mubr.f32.mxu0 0.0
    %580 = vmatmul.mubr.f32.gmra.mrb[0].mxu0 %v502
    %v581 = vpop.f32.mrb[0].mxu0
    %v582 = vadd.f32 %v486, %v581
    %v583 = vpop.f32.mrb[0].mxu0
    %584 = vmatprep.mubr.f32.mxu0 0.0
    %585 = vmatmul.mubr.f32.gmra.mrb[0].mxu0 %v505
    %v586 = vpop.f32.mrb[0].mxu0
    %v587 = vadd.f32 %v491, %v586
    %v588 = vpop.f32.mrb[0].mxu0
    %589 = vmatprep.mubr.f32.mxu0 0.0
    %590 = vmatmul.mubr.f32.gmra.mrb[0].mxu0 %v508
    %v591 = vpop.f32.mrb[0].mxu0
    %v592 = vadd.f32 %v496, %v591
    %v593 = vpop.f32.mrb[0].mxu0
    %594 = vdwg.mxu0
    %v595 = vmax.f32 %v577, 0.0
    %v596 = vmax.f32 %v582, 0.0
    %v597 = vmax.f32 %v587, 0.0
    %v598 = vmax.f32 %v592, 0.0
    %v599 = vld [vmem:[%s3 + $0xa0] sm:$0xff]
    %v600 = vld [vmem:[%s3 + $0xa8] sm:$0xff]
    %v601 = vld [vmem:[%s3 + $0xb0] sm:$0xff]
    %v602 = vld [vmem:[%s3 + $0xb8] sm:$0xff]
    %604 = vset.pattern.permute.xlu0 0
    %605 = vperm.xlu0 %604, %v599
    %v606 = vpop.permute.xlu0 %605
    %609 = vset.pattern.permute.xlu0 0
    %610 = vperm.xlu0 %609, %v600
    %v611 = vpop.permute.xlu0 %610
    %614 = vset.pattern.permute.xlu0 0
    %615 = vperm.xlu0 %614, %v601
    %v616 = vpop.permute.xlu0 %615
    %619 = vset.pattern.permute.xlu0 0
    %620 = vperm.xlu0 %619, %v602
    %v621 = vpop.permute.xlu0 %620
    %v623 = vmul.f32 %v606, %v595
    %v624 = vmul.f32 %v611, %v596
    %v625 = vmul.f32 %v616, %v597
    %v626 = vmul.f32 %v621, %v598
    %v627 = vadd.f32 %v623, %v624
    %v628 = vadd.f32 %v627, %v625
    %v629 = vadd.f32 %v628, %v626
    %v630 = vrot.slane %v629, 4
    %v631 = vadd.f32 %v629, %v630
    %v632 = vrot.slane %v631, 2
    %v633 = vadd.f32 %v631, %v632
    %v634 = vrot.slane %v633, 1
    %v635 = vadd.f32 %v633, %v634
    %v636 = vld [vmem:[%s3 + $0xc0] sm:$0x1]
    %638 = vset.pattern.permute.xlu0 0
    %639 = vperm.xlu0 %638, %v636
    %v640 = vpop.permute.xlu0 %639
    %v642 = vadd.f32 %v635, %v640
    %643 = vst [vmem:[#allocation2] sm:$0x1] %v642
    // Predicated region
    $region18: #{tpu_custom_call.1} parent=1 // pred_check
      _
    $region19: #{tpu_custom_call.1} parent=1 // pred_check_branch
      %645 = sbr.rel (0) target = $region21
    $region20: #{tpu_custom_call.1} parent=1 // pred_region
      %s647 = ssub.s32 16, 16
      %648 = vsyncadd [#allocation3], %s647
      %s650 = sshll.u32 [#allocation2], 4
      %s651 = int_to_ptr.vmem [resolvable:$true] %s650
      %653 = dma.vmem_to_hbm [thread:$0]  %s651, 16, %s4, [#allocation3]
    $region21: #{tpu_custom_call.1} parent=1 // pred_fallthru
      _
    // Predicated region
    $region22: #{tpu_custom_call.1} parent=1 // pred_check
      _
    $region23: #{tpu_custom_call.1} parent=1 // pred_check_branch
      %655 = sbr.rel (0) target = $region25
    $region24: #{tpu_custom_call.1} parent=1 // pred_region
      %656 = dma.done [#allocation3], 16
    $region25: #{tpu_custom_call.1} parent=1 // pred_fallthru
      _
    %657 = vsyncpa [#allocation3], 1

</llo_original>
